<compile_context>
chip_gen: v7x
topology: tpu7x:2x2x1
jax: 0.10.0
libtpu: 0.0.40
codegen_flags: <defaults>
</compile_context>

<pallas_src>
import functools

import jax
import jax.numpy as jnp
from jax import lax
from jax.experimental import pallas as pl
from jax.experimental.pallas import tpu as pltpu

BN_EPS = 1e-5      # PyTorch BatchNorm1d default eps
_LANE = 128        # feature dims padded to multiples of the lane width
_SUBLANE = 16      # batch rows padded to a multiple of 16 (bf16 sublane packing)


def _round_up(x, m):
    return (x + m - 1) // m * m


def _pad2(a, rows, cols):
    r, c = a.shape
    if r == rows and c == cols:
        return a
    return jnp.pad(a, ((0, rows - r), (0, cols - c)))


def _bn_relu(y, gamma, beta, n_valid, n_pad, relu):
    """BatchNorm1d (training mode: batch mean, biased variance) + optional ReLU.

    y: (n_pad, d) f32 with padded rows (index >= n_valid) exactly zero on entry.
    Returns f32 with padded rows forced back to exactly zero, so downstream matmul
    column sums / BN statistics stay exact.
    """
    inv_n = 1.0 / float(n_valid)
    # Padded rows of y are zero, so the sum over n_pad rows equals the true batch sum.
    mean = jnp.sum(y, axis=0, keepdims=True) * inv_n
    d = y - mean
    valid = None
    if n_pad != n_valid:
        valid = lax.broadcasted_iota(jnp.int32, y.shape, 0) < n_valid
        d = jnp.where(valid, d, 0.0)
    # Two-pass variance: avoids E[y^2] - E[y]^2 cancellation for post-ReLU activations.
    var = jnp.sum(d * d, axis=0, keepdims=True) * inv_n
    z = d * (gamma * lax.rsqrt(var + BN_EPS)) + beta
    if relu:
        z = jnp.maximum(z, 0.0)
    if valid is not None:
        z = jnp.where(valid, z, 0.0)
    return z


def _fused_mlp_kernel(n_valid, n_pad, num_matmuls, *refs):
    """Entire projection MLP in one VMEM-resident kernel (no grid).

    refs = (x_ref, [w_ref, gamma_ref, beta_ref] * num_matmuls, out_ref).
    Each matmul hits the MXU with bf16 operands and f32 accumulation; the BN/ReLU
    epilogues stay in f32 on the VPU, feeding the next matmul without touching HBM.
    """
    x_ref, o_ref = refs[0], refs[-1]
    layer_refs = refs[1:-1]

    h = x_ref[...]                                           # bf16 (n_pad, d_in_pad)
    for li in range(num_matmuls):
        w_ref, g_ref, b_ref = layer_refs[3 * li:3 * li + 3]
        y = jnp.dot(h.astype(jnp.bfloat16), w_ref[...],
                    preferred_element_type=jnp.float32)      # (n_pad, d_out) f32
        h = _bn_relu(y, g_ref[...], b_ref[...], n_valid, n_pad,
                     relu=(li < num_matmuls - 1))            # last layer: no ReLU
    o_ref[...] = h.astype(o_ref.dtype)


def _vmem_limit_bytes(footprint):
    """Request enough VMEM for the resident footprint, never the full physical VMEM."""
    try:
        cap = int(pltpu.get_tpu_info().vmem_capacity_bytes) * 3 // 4
    except Exception:
        cap = 48 << 20        # safe on v7x (64 MiB physical), generous on v5e/v6e
    return min(max(int(1.5 * footprint) + (4 << 20), 16 << 20), cap)


def _fused_projection_mlp(x_pad, layers, n_valid, out_dtype):
    """layers: list of (w_pad bf16 (d_in_pad, d_out_pad), gamma f32 (1, d_out_pad),
    beta f32 (1, d_out_pad)). Returns (n_pad, d_out_pad_last) in out_dtype."""
    n_pad, _ = x_pad.shape
    o_pad = layers[-1][0].shape[1]

    # Resident footprint (single invocation, no grid => no double buffering):
    # bf16 x + bf16 weights + (1,d)->(8,d)-sublane-padded f32 gamma/beta + output
    # + f32 intermediate activations the compiler keeps live between layers.
    fp = x_pad.size * 2 + n_pad * o_pad * jnp.dtype(out_dtype).itemsize
    for w, _, _ in layers:
        fp += w.size * 2                         # bf16 weight matrix
        fp += 2 * 8 * w.shape[1] * 4             # gamma + beta as (8, d_out) f32 tiles
        fp += 2 * n_pad * w.shape[1] * 4         # live f32 activation working set

    operands = [x_pad]
    for w, g, b in layers:
        operands += [w, g, b]

    vmem_spec = pl.BlockSpec(memory_space=pltpu.MemorySpace.VMEM)
    return pl.pallas_call(
        functools.partial(_fused_mlp_kernel, n_valid, n_pad, len(layers)),
        out_shape=jax.ShapeDtypeStruct((n_pad, o_pad), out_dtype),
        in_specs=[vmem_spec] * len(operands),
        out_specs=vmem_spec,
        compiler_params=pltpu.CompilerParams(
            vmem_limit_bytes=_vmem_limit_bytes(fp)),
    )(*operands)


def init_params(key, in_dim=256, hidden_dim=256, out_dim=256):
    """nn.Linear / nn.BatchNorm1d-style init. Linear bias omitted: it is cancelled
    exactly by the following BatchNorm's batch-mean subtraction (dead work)."""
    ks = jax.random.split(key, 3)

    def linear_w(k, fan_in, fan_out):
        bound = 1.0 / (fan_in ** 0.5)
        # pre-transposed to (in, out) so the kernel computes y = x @ W on the MXU
        return jax.random.uniform(k, (fan_in, fan_out), jnp.float32, -bound, bound)

    def bn(dim):
        return jnp.ones((1, dim), jnp.float32), jnp.zeros((1, dim), jnp.float32)

    w1 = linear_w(ks[0], in_dim, hidden_dim)
    g1, be1 = bn(hidden_dim)
    w2 = linear_w(ks[1], hidden_dim, hidden_dim)
    g2, be2 = bn(hidden_dim)
    w3 = linear_w(ks[2], hidden_dim, out_dim)
    g3, be3 = bn(out_dim)
    return dict(w1=w1, g1=g1, be1=be1,
                w2=w2, g2=g2, be2=be2,
                w3=w3, g3=g3, be3=be3)


def prepare_params(params):
    """One-time prep OUTSIDE the jitted forward: zero-pad feature dims to lane
    multiples and cast MXU weight operands to bf16 (removes per-call cast/pad
    passes from the critical path)."""
    d_in, h_dim = params["w1"].shape
    o_dim = params["w3"].shape[1]
    d_in_p, h_p, o_p = (_round_up(d, _LANE) for d in (d_in, h_dim, o_dim))

    def prep(w, g, b, rows, cols):
        return (jax.device_put(_pad2(w, rows, cols).astype(jnp.bfloat16)),
                jax.device_put(_pad2(g, 1, cols).astype(jnp.float32)),
                jax.device_put(_pad2(b, 1, cols).astype(jnp.float32)))

    return dict(
        layer1=prep(params["w1"], params["g1"], params["be1"], d_in_p, h_p),
        layer2=prep(params["w2"], params["g2"], params["be2"], h_p, h_p),
        layer3=prep(params["w3"], params["g3"], params["be3"], h_p, o_p),
        out_dim=o_dim,
    )


@functools.partial(jax.jit, static_argnames=("num_layers", "out_dim"))
def _projection_mlp_impl(x, layer1, layer2, layer3, num_layers, out_dim):
    n, d_in = x.shape
    d_in_pad = layer1[0].shape[0]
    n_pad = _round_up(max(n, 1), _SUBLANE)

    # Only the activations are padded/cast per call (params are pre-prepped).
    x_p = _pad2(x, n_pad, d_in_pad).astype(jnp.bfloat16)

    layers = [layer1, layer2, layer3] if num_layers == 3 else [layer1, layer3]
    out = _fused_projection_mlp(x_p, layers, n, jnp.float32)
    return out[:n, :out_dim]


def projection_mlp_forward(x, prepped, num_layers):
    """Mirrors projection_MLP.forward: returns (x_out, x_net)."""
    x_net = x
    if num_layers == 0:
        return x, x_net
    if num_layers not in (2, 3):
        raise Exception
    out = _projection_mlp_impl(x, prepped["layer1"], prepped["layer2"],
                               prepped["layer3"], num_layers, prepped["out_dim"])
    return out, x_net


if __name__ == "__main__":
    key = jax.random.PRNGKey(0)
    k_x, k_p = jax.random.split(key)

    in_dim = hidden_dim = out_dim = 256   # module defaults; lane-dense (multiple of 128)
    batch = 8
    x = jax.random.normal(k_x, (batch, in_dim), dtype=jnp.float32)
    params = init_params(k_p, in_dim, hidden_dim, out_dim)
    prepped = prepare_params(params)       # one-time pad + bf16 cast, outside jit

    # Pure-JAX f32 reference: Linear(no bias) -> BN(batch stats, biased var) -> ReLU.
    def ref_layer(h, w, g, b, relu):
        y = h @ w
        mean = y.mean(0, keepdims=True)
        var = ((y - mean) ** 2).mean(0, keepdims=True)
        y = (y - mean) / jnp.sqrt(var + BN_EPS) * g + b
        return jnp.maximum(y, 0.0) if relu else y

    def ref_forward(xx, p, num_layers):
        h = ref_layer(xx, p["w1"], p["g1"], p["be1"], True)
        if num_layers == 3:
            h = ref_layer(h, p["w2"], p["g2"], p["be2"], True)
        return ref_layer(h, p["w3"], p["g3"], p["be3"], False)

    # num_layers == 0 (module default): identity passthrough
    y0, y0_net = projection_mlp_forward(x, prepped, num_layers=0)

    # num_layers == 3: full 3-layer projection MLP (one fused Pallas kernel)
    y3, y3_net = projection_mlp_forward(x, prepped, num_layers=3)

    # num_layers == 2: layer1 -> layer3 (one fused Pallas kernel, layer2 operands skipped)
    y2, _ = projection_mlp_forward(x, prepped, num_layers=2)
    jax.block_until_ready((y3, y2))

    assert y0.shape == x.shape and bool(jnp.allclose(y3_net, x))
    assert y3.shape == (batch, out_dim) and y2.shape == (batch, out_dim)
    assert bool(jnp.all(jnp.isfinite(y3))) and bool(jnp.all(jnp.isfinite(y2)))
    # bf16 MXU inputs with f32 accumulation -> loose tolerance vs the f32 reference.
    assert float(jnp.max(jnp.abs(y3 - ref_forward(x, params, 3)))) < 0.25
    assert float(jnp.max(jnp.abs(y2 - ref_forward(x, params, 2)))) < 0.25
    print("KERNEL_OK")
</pallas_src>

<mosaic_0001>
module attributes {stable_mosaic.version = 11 : i64} {
  func.func @_fused_mlp_kernel(%arg0: memref<16x256xbf16, #tpu.memory_space<vmem>>, %arg1: memref<256x256xbf16, #tpu.memory_space<vmem>>, %arg2: memref<1x256xf32, #tpu.memory_space<vmem>>, %arg3: memref<1x256xf32, #tpu.memory_space<vmem>>, %arg4: memref<256x256xbf16, #tpu.memory_space<vmem>>, %arg5: memref<1x256xf32, #tpu.memory_space<vmem>>, %arg6: memref<1x256xf32, #tpu.memory_space<vmem>>, %arg7: memref<256x256xbf16, #tpu.memory_space<vmem>>, %arg8: memref<1x256xf32, #tpu.memory_space<vmem>>, %arg9: memref<1x256xf32, #tpu.memory_space<vmem>>, %arg10: memref<16x256xf32, #tpu.memory_space<vmem>>) attributes {dimension_semantics = [], scalar_prefetch = 0 : i64, scratch_operands = 0 : i64, tpu.core_type = #tpu.core_type<tc>} {
    %c0 = arith.constant 0 : index
    %c0_0 = arith.constant 0 : index
    %0 = vector.load %arg0[%c0, %c0_0] : memref<16x256xbf16, #tpu.memory_space<vmem>>, vector<16x256xbf16>
    %c0_1 = arith.constant 0 : index
    %c0_2 = arith.constant 0 : index
    %1 = vector.load %arg1[%c0_1, %c0_2] : memref<256x256xbf16, #tpu.memory_space<vmem>>, vector<256x256xbf16>
    %cst = arith.constant dense<0.000000e+00> : vector<16x256xf32>
    %2 = tpu.matmul %0, %1, %cst {dimension_numbers = #tpu.dot_dimension_numbers<[1], [0], [0], [1], [0, 0, 1, 1], [], []>} : vector<16x256xbf16>, vector<256x256xbf16>, vector<16x256xf32> -> vector<16x256xf32>
    %c0_3 = arith.constant 0 : index
    %c0_4 = arith.constant 0 : index
    %3 = vector.load %arg2[%c0_3, %c0_4] : memref<1x256xf32, #tpu.memory_space<vmem>>, vector<1x256xf32>
    %c0_5 = arith.constant 0 : index
    %c0_6 = arith.constant 0 : index
    %4 = vector.load %arg3[%c0_5, %c0_6] : memref<1x256xf32, #tpu.memory_space<vmem>>, vector<1x256xf32>
    %cst_7 = arith.constant dense<0.000000e+00> : vector<256xf32>
    %5 = vector.multi_reduction <add>, %2, %cst_7 [0] : vector<16x256xf32> to vector<256xf32>
    %6 = vector.shape_cast %5 : vector<256xf32> to vector<1x256xf32>
    %cst_8 = arith.constant 1.250000e-01 : f32
    %7 = vector.broadcast %cst_8 : f32 to vector<1x256xf32>
    %8 = arith.mulf %6, %7 : vector<1x256xf32>
    %9 = vector.broadcast %8 : vector<1x256xf32> to vector<16x256xf32>
    %10 = arith.subf %2, %9 : vector<16x256xf32>
    %11 = tpu.iota {dimensions = array<i32: 0>} : vector<16x256xi32>
    %c8_i32 = arith.constant 8 : i32
    %12 = vector.broadcast %c8_i32 : i32 to vector<16x256xi32>
    %13 = arith.cmpi slt, %11, %12 : vector<16x256xi32>
    %cst_9 = arith.constant 0.000000e+00 : f32
    %14 = vector.broadcast %cst_9 : f32 to vector<16x256xf32>
    %15 = arith.select %13, %10, %14 : vector<16x256xi1>, vector<16x256xf32>
    %16 = arith.mulf %15, %15 : vector<16x256xf32>
    %cst_10 = arith.constant dense<0.000000e+00> : vector<256xf32>
    %17 = vector.multi_reduction <add>, %16, %cst_10 [0] : vector<16x256xf32> to vector<256xf32>
    %18 = vector.shape_cast %17 : vector<256xf32> to vector<1x256xf32>
    %cst_11 = arith.constant 1.250000e-01 : f32
    %19 = vector.broadcast %cst_11 : f32 to vector<1x256xf32>
    %20 = arith.mulf %18, %19 : vector<1x256xf32>
    %cst_12 = arith.constant 9.99999974E-6 : f32
    %21 = vector.broadcast %cst_12 : f32 to vector<1x256xf32>
    %22 = arith.addf %20, %21 : vector<1x256xf32>
    %23 = math.rsqrt %22 : vector<1x256xf32>
    %24 = arith.mulf %3, %23 : vector<1x256xf32>
    %25 = vector.broadcast %24 : vector<1x256xf32> to vector<16x256xf32>
    %26 = arith.mulf %15, %25 : vector<16x256xf32>
    %27 = vector.broadcast %4 : vector<1x256xf32> to vector<16x256xf32>
    %28 = arith.addf %26, %27 : vector<16x256xf32>
    %cst_13 = arith.constant 0.000000e+00 : f32
    %29 = vector.broadcast %cst_13 : f32 to vector<16x256xf32>
    %30 = arith.maximumf %28, %29 : vector<16x256xf32>
    %cst_14 = arith.constant 0.000000e+00 : f32
    %31 = vector.broadcast %cst_14 : f32 to vector<16x256xf32>
    %32 = arith.select %13, %30, %31 : vector<16x256xi1>, vector<16x256xf32>
    %33 = arith.truncf %32 : vector<16x256xf32> to vector<16x256xbf16>
    %c0_15 = arith.constant 0 : index
    %c0_16 = arith.constant 0 : index
    %34 = vector.load %arg4[%c0_15, %c0_16] : memref<256x256xbf16, #tpu.memory_space<vmem>>, vector<256x256xbf16>
    %cst_17 = arith.constant dense<0.000000e+00> : vector<16x256xf32>
    %35 = tpu.matmul %33, %34, %cst_17 {dimension_numbers = #tpu.dot_dimension_numbers<[1], [0], [0], [1], [0, 0, 1, 1], [], []>} : vector<16x256xbf16>, vector<256x256xbf16>, vector<16x256xf32> -> vector<16x256xf32>
    %c0_18 = arith.constant 0 : index
    %c0_19 = arith.constant 0 : index
    %36 = vector.load %arg5[%c0_18, %c0_19] : memref<1x256xf32, #tpu.memory_space<vmem>>, vector<1x256xf32>
    %c0_20 = arith.constant 0 : index
    %c0_21 = arith.constant 0 : index
    %37 = vector.load %arg6[%c0_20, %c0_21] : memref<1x256xf32, #tpu.memory_space<vmem>>, vector<1x256xf32>
    %cst_22 = arith.constant dense<0.000000e+00> : vector<256xf32>
    %38 = vector.multi_reduction <add>, %35, %cst_22 [0] : vector<16x256xf32> to vector<256xf32>
    %39 = vector.shape_cast %38 : vector<256xf32> to vector<1x256xf32>
    %cst_23 = arith.constant 1.250000e-01 : f32
    %40 = vector.broadcast %cst_23 : f32 to vector<1x256xf32>
    %41 = arith.mulf %39, %40 : vector<1x256xf32>
    %42 = vector.broadcast %41 : vector<1x256xf32> to vector<16x256xf32>
    %43 = arith.subf %35, %42 : vector<16x256xf32>
    %44 = tpu.iota {dimensions = array<i32: 0>} : vector<16x256xi32>
    %c8_i32_24 = arith.constant 8 : i32
    %45 = vector.broadcast %c8_i32_24 : i32 to vector<16x256xi32>
    %46 = arith.cmpi slt, %44, %45 : vector<16x256xi32>
    %cst_25 = arith.constant 0.000000e+00 : f32
    %47 = vector.broadcast %cst_25 : f32 to vector<16x256xf32>
    %48 = arith.select %46, %43, %47 : vector<16x256xi1>, vector<16x256xf32>
    %49 = arith.mulf %48, %48 : vector<16x256xf32>
    %cst_26 = arith.constant dense<0.000000e+00> : vector<256xf32>
    %50 = vector.multi_reduction <add>, %49, %cst_26 [0] : vector<16x256xf32> to vector<256xf32>
    %51 = vector.shape_cast %50 : vector<256xf32> to vector<1x256xf32>
    %cst_27 = arith.constant 1.250000e-01 : f32
    %52 = vector.broadcast %cst_27 : f32 to vector<1x256xf32>
    %53 = arith.mulf %51, %52 : vector<1x256xf32>
    %cst_28 = arith.constant 9.99999974E-6 : f32
    %54 = vector.broadcast %cst_28 : f32 to vector<1x256xf32>
    %55 = arith.addf %53, %54 : vector<1x256xf32>
    %56 = math.rsqrt %55 : vector<1x256xf32>
    %57 = arith.mulf %36, %56 : vector<1x256xf32>
    %58 = vector.broadcast %57 : vector<1x256xf32> to vector<16x256xf32>
    %59 = arith.mulf %48, %58 : vector<16x256xf32>
    %60 = vector.broadcast %37 : vector<1x256xf32> to vector<16x256xf32>
    %61 = arith.addf %59, %60 : vector<16x256xf32>
    %cst_29 = arith.constant 0.000000e+00 : f32
    %62 = vector.broadcast %cst_29 : f32 to vector<16x256xf32>
    %63 = arith.maximumf %61, %62 : vector<16x256xf32>
    %cst_30 = arith.constant 0.000000e+00 : f32
    %64 = vector.broadcast %cst_30 : f32 to vector<16x256xf32>
    %65 = arith.select %46, %63, %64 : vector<16x256xi1>, vector<16x256xf32>
    %66 = arith.truncf %65 : vector<16x256xf32> to vector<16x256xbf16>
    %c0_31 = arith.constant 0 : index
    %c0_32 = arith.constant 0 : index
    %67 = vector.load %arg7[%c0_31, %c0_32] : memref<256x256xbf16, #tpu.memory_space<vmem>>, vector<256x256xbf16>
    %cst_33 = arith.constant dense<0.000000e+00> : vector<16x256xf32>
    %68 = tpu.matmul %66, %67, %cst_33 {dimension_numbers = #tpu.dot_dimension_numbers<[1], [0], [0], [1], [0, 0, 1, 1], [], []>} : vector<16x256xbf16>, vector<256x256xbf16>, vector<16x256xf32> -> vector<16x256xf32>
    %c0_34 = arith.constant 0 : index
    %c0_35 = arith.constant 0 : index
    %69 = vector.load %arg8[%c0_34, %c0_35] : memref<1x256xf32, #tpu.memory_space<vmem>>, vector<1x256xf32>
    %c0_36 = arith.constant 0 : index
    %c0_37 = arith.constant 0 : index
    %70 = vector.load %arg9[%c0_36, %c0_37] : memref<1x256xf32, #tpu.memory_space<vmem>>, vector<1x256xf32>
    %cst_38 = arith.constant dense<0.000000e+00> : vector<256xf32>
    %71 = vector.multi_reduction <add>, %68, %cst_38 [0] : vector<16x256xf32> to vector<256xf32>
    %72 = vector.shape_cast %71 : vector<256xf32> to vector<1x256xf32>
    %cst_39 = arith.constant 1.250000e-01 : f32
    %73 = vector.broadcast %cst_39 : f32 to vector<1x256xf32>
    %74 = arith.mulf %72, %73 : vector<1x256xf32>
    %75 = vector.broadcast %74 : vector<1x256xf32> to vector<16x256xf32>
    %76 = arith.subf %68, %75 : vector<16x256xf32>
    %77 = tpu.iota {dimensions = array<i32: 0>} : vector<16x256xi32>
    %c8_i32_40 = arith.constant 8 : i32
    %78 = vector.broadcast %c8_i32_40 : i32 to vector<16x256xi32>
    %79 = arith.cmpi slt, %77, %78 : vector<16x256xi32>
    %cst_41 = arith.constant 0.000000e+00 : f32
    %80 = vector.broadcast %cst_41 : f32 to vector<16x256xf32>
    %81 = arith.select %79, %76, %80 : vector<16x256xi1>, vector<16x256xf32>
    %82 = arith.mulf %81, %81 : vector<16x256xf32>
    %cst_42 = arith.constant dense<0.000000e+00> : vector<256xf32>
    %83 = vector.multi_reduction <add>, %82, %cst_42 [0] : vector<16x256xf32> to vector<256xf32>
    %84 = vector.shape_cast %83 : vector<256xf32> to vector<1x256xf32>
    %cst_43 = arith.constant 1.250000e-01 : f32
    %85 = vector.broadcast %cst_43 : f32 to vector<1x256xf32>
    %86 = arith.mulf %84, %85 : vector<1x256xf32>
    %cst_44 = arith.constant 9.99999974E-6 : f32
    %87 = vector.broadcast %cst_44 : f32 to vector<1x256xf32>
    %88 = arith.addf %86, %87 : vector<1x256xf32>
    %89 = math.rsqrt %88 : vector<1x256xf32>
    %90 = arith.mulf %69, %89 : vector<1x256xf32>
    %91 = vector.broadcast %90 : vector<1x256xf32> to vector<16x256xf32>
    %92 = arith.mulf %81, %91 : vector<16x256xf32>
    %93 = vector.broadcast %70 : vector<1x256xf32> to vector<16x256xf32>
    %94 = arith.addf %92, %93 : vector<16x256xf32>
    %cst_45 = arith.constant 0.000000e+00 : f32
    %95 = vector.broadcast %cst_45 : f32 to vector<16x256xf32>
    %96 = arith.select %79, %94, %95 : vector<16x256xi1>, vector<16x256xf32>
    %c0_46 = arith.constant 0 : index
    %c0_47 = arith.constant 0 : index
    %97 = vector.load %arg10[%c0_46, %c0_47] : memref<16x256xf32, #tpu.memory_space<vmem>>, vector<16x256xf32>
    tpu.vector_store %arg10[%c0_46, %c0_47], %96 {strides = array<i32>} : memref<16x256xf32, #tpu.memory_space<vmem>>, vector<16x256xf32>,
    return
  }
}

</mosaic_0001>

<llo_original>
// kernel: _projection_mlp_impl.1
$region0: #{_projection_mlp_impl.1}
  #allocation0 [shape = 'u32[]', space=smem, size = 0x4, offset = 0x4, fixed_abs, tag = 'smem constant byte address 0x4 - core index']
  #allocation1 [shape = 'u32[144,128]{1,0:T(1,128)}', space=vmem, size = 0x12000, scoped, tag = 'internal scratch']
  %s0 = inlined_call_operand.vmem [shape: bf16[16,256], index: 0, kind: input, shape index: {}]
  %s1 = inlined_call_operand.hbm [shape: bf16[256,256], index: 1, kind: input, shape index: {}]
  %s2 = inlined_call_operand.vmem [shape: f32[1,256], index: 2, kind: input, shape index: {}]
  %s3 = inlined_call_operand.vmem [shape: f32[1,256], index: 3, kind: input, shape index: {}]
  %s4 = inlined_call_operand.hbm [shape: bf16[256,256], index: 4, kind: input, shape index: {}]
  %s5 = inlined_call_operand.vmem [shape: f32[1,256], index: 5, kind: input, shape index: {}]
  %s6 = inlined_call_operand.vmem [shape: f32[1,256], index: 6, kind: input, shape index: {}]
  %s7 = inlined_call_operand.hbm [shape: bf16[256,256], index: 7, kind: input, shape index: {}]
  %s8 = inlined_call_operand.vmem [shape: f32[1,256], index: 8, kind: input, shape index: {}]
  %s9 = inlined_call_operand.vmem [shape: f32[1,256], index: 9, kind: input, shape index: {}]
  %s10 = inlined_call_operand.vmem [shape: f32[16,256], index: 10, kind: output, shape index: {}]
  %s11 = sld [smem:[#allocation0]]
  $region62: #{_projection_mlp_impl.1} parent=0
    _
  %s13 = ssub.s32 1, %s11
  %s14 = scalar_select 0, %s13, %s11
  $region1: #{_projection_mlp_impl.1} parent=0
    #allocation2 [shape = 'u8[131072]{0}', space=vmem, size = 0x20000, scoped, tag = 'input window, operand 1, single buffered']
    #allocation3 [shape = 's32[1]{0}', space=sflag, size = 0x4, scoped, tag = 'scoped memory for _projection_mlp_impl.1']
    #allocation4 [shape = 'u8[131072]{0}', space=vmem, size = 0x20000, scoped, tag = 'input window, operand 4, single buffered']
    #allocation5 [shape = 's32[1]{0}', space=sflag, size = 0x4, scoped, tag = 'scoped memory for _projection_mlp_impl.1']
    #allocation6 [shape = 'u8[131072]{0}', space=vmem, size = 0x20000, scoped, tag = 'input window, operand 7, single buffered']
    %15 = vsyncpa [#allocation3], 0
    %16 = vsyncpa [#allocation5], 0
    // Predicated region
    $region2: #{_projection_mlp_impl.1} parent=1 // pred_check
      _
    $region3: #{_projection_mlp_impl.1} parent=1 // pred_check_branch
      %18 = sbr.rel (0) target = $region5
    $region4: #{_projection_mlp_impl.1} parent=1 // pred_region
      _
    $region5: #{_projection_mlp_impl.1} parent=1 // pred_fallthru
      _
    // Predicated region
    $region6: #{_projection_mlp_impl.1} parent=1 // pred_check
      _
    $region7: #{_projection_mlp_impl.1} parent=1 // pred_check_branch
      %20 = sbr.rel (0) target = $region9
    $region8: #{_projection_mlp_impl.1} parent=1 // pred_region
      %s22 = ssub.s32 4096, 4096
      %23 = vsyncadd [#allocation3], %s22
      %s24 = sshll.u32 [#allocation2], 4
      %s25 = int_to_ptr.vmem [resolvable:$true] %s24
      %30 = dma.hbm_to_vmem [thread:$0]  %s1, 4096, %s25, [#allocation3], 128, 128, 8
    $region9: #{_projection_mlp_impl.1} parent=1 // pred_fallthru
      _
    // Predicated region
    $region10: #{_projection_mlp_impl.1} parent=1 // pred_check
      _
    $region11: #{_projection_mlp_impl.1} parent=1 // pred_check_branch
      %32 = sbr.rel (0) target = $region13
    $region12: #{_projection_mlp_impl.1} parent=1 // pred_region
      _
    $region13: #{_projection_mlp_impl.1} parent=1 // pred_fallthru
      _
    // Predicated region
    $region14: #{_projection_mlp_impl.1} parent=1 // pred_check
      _
    $region15: #{_projection_mlp_impl.1} parent=1 // pred_check_branch
      %34 = sbr.rel (0) target = $region17
    $region16: #{_projection_mlp_impl.1} parent=1 // pred_region
      _
    $region17: #{_projection_mlp_impl.1} parent=1 // pred_fallthru
      _
    // Predicated region
    $region18: #{_projection_mlp_impl.1} parent=1 // pred_check
      _
    $region19: #{_projection_mlp_impl.1} parent=1 // pred_check_branch
      %36 = sbr.rel (0) target = $region21
    $region20: #{_projection_mlp_impl.1} parent=1 // pred_region
      %s38 = ssub.s32 4096, 4096
      %39 = vsyncadd [#allocation5], %s38
      %s40 = sshll.u32 [#allocation4], 4
      %s41 = int_to_ptr.vmem [resolvable:$true] %s40
      %46 = dma.hbm_to_vmem [thread:$0]  %s4, 4096, %s41, [#allocation5], 128, 128, 8
    $region21: #{_projection_mlp_impl.1} parent=1 // pred_fallthru
      _
    // Predicated region
    $region22: #{_projection_mlp_impl.1} parent=1 // pred_check
      _
    $region23: #{_projection_mlp_impl.1} parent=1 // pred_check_branch
      %48 = sbr.rel (0) target = $region25
    $region24: #{_projection_mlp_impl.1} parent=1 // pred_region
      _
    $region25: #{_projection_mlp_impl.1} parent=1 // pred_fallthru
      _
    // Predicated region
    $region26: #{_projection_mlp_impl.1} parent=1 // pred_check
      _
    $region27: #{_projection_mlp_impl.1} parent=1 // pred_check_branch
      %50 = sbr.rel (0) target = $region29
    $region28: #{_projection_mlp_impl.1} parent=1 // pred_region
      _
    $region29: #{_projection_mlp_impl.1} parent=1 // pred_fallthru
      _
    // Predicated region
    $region30: #{_projection_mlp_impl.1} parent=1 // pred_check
      _
    $region31: #{_projection_mlp_impl.1} parent=1 // pred_check_branch
      %52 = sbr.rel (0) target = $region33
    $region32: #{_projection_mlp_impl.1} parent=1 // pred_region
      %s54 = ssub.s32 4096, 4096
      %55 = vsyncadd [#allocation5], %s54
      %s56 = sshll.u32 [#allocation6], 4
      %s57 = int_to_ptr.vmem [resolvable:$true] %s56
      %62 = dma.hbm_to_vmem [thread:$0]  %s7, 4096, %s57, [#allocation5], 128, 128, 8
    $region33: #{_projection_mlp_impl.1} parent=1 // pred_fallthru
      _
    // Predicated region
    $region34: #{_projection_mlp_impl.1} parent=1 // pred_check
      _
    $region35: #{_projection_mlp_impl.1} parent=1 // pred_check_branch
      %64 = sbr.rel (0) target = $region37
    $region36: #{_projection_mlp_impl.1} parent=1 // pred_region
      _
    $region37: #{_projection_mlp_impl.1} parent=1 // pred_fallthru
      _
    // Predicated region
    $region38: #{_projection_mlp_impl.1} parent=1 // pred_check
      _
    $region39: #{_projection_mlp_impl.1} parent=1 // pred_check_branch
      %66 = sbr.rel (0) target = $region41
    $region40: #{_projection_mlp_impl.1} parent=1 // pred_region
      _
    $region41: #{_projection_mlp_impl.1} parent=1 // pred_fallthru
      _
    // Predicated region
    $region42: #{_projection_mlp_impl.1} parent=1 // pred_check
      _
    $region43: #{_projection_mlp_impl.1} parent=1 // pred_check_branch
      %68 = sbr.rel (0) target = $region45
    $region44: #{_projection_mlp_impl.1} parent=1 // pred_region
      %69 = dma.done [#allocation3], 4096
    $region45: #{_projection_mlp_impl.1} parent=1 // pred_fallthru
      _
    // Predicated region
    $region46: #{_projection_mlp_impl.1} parent=1 // pred_check
      _
    $region47: #{_projection_mlp_impl.1} parent=1 // pred_check_branch
      %71 = sbr.rel (0) target = $region49
    $region48: #{_projection_mlp_impl.1} parent=1 // pred_region
      %72 = dma.done [#allocation5], 4096
    $region49: #{_projection_mlp_impl.1} parent=1 // pred_fallthru
      _
    // Predicated region
    $region50: #{_projection_mlp_impl.1} parent=1 // pred_check
      _
    $region51: #{_projection_mlp_impl.1} parent=1 // pred_check_branch
      %74 = sbr.rel (0) target = $region53
    $region52: #{_projection_mlp_impl.1} parent=1 // pred_region
      %75 = dma.done [#allocation5], 4096
    $region53: #{_projection_mlp_impl.1} parent=1 // pred_fallthru
      _
    %v76 = vld [vmem:[%s0] sm:$0xff]
    %v77 = vld [vmem:[%s0 + $0x8] sm:$0xff]
    %v78 = vld [vmem:[#allocation2] sm:$0xff]
    %v79 = vld [vmem:[#allocation2 + $0x8] sm:$0xff]
    %v80 = vld [vmem:[#allocation2 + $0x10] sm:$0xff]
    %v81 = vld [vmem:[#allocation2 + $0x18] sm:$0xff]
    %v82 = vld [vmem:[#allocation2 + $0x20] sm:$0xff]
    %v83 = vld [vmem:[#allocation2 + $0x28] sm:$0xff]
    %v84 = vld [vmem:[#allocation2 + $0x30] sm:$0xff]
    %v85 = vld [vmem:[#allocation2 + $0x38] sm:$0xff]
    %v86 = vld [vmem:[#allocation2 + $0x40] sm:$0xff]
    %v87 = vld [vmem:[#allocation2 + $0x48] sm:$0xff]
    %v88 = vld [vmem:[#allocation2 + $0x50] sm:$0xff]
    %v89 = vld [vmem:[#allocation2 + $0x58] sm:$0xff]
    %v90 = vld [vmem:[#allocation2 + $0x60] sm:$0xff]
    %v91 = vld [vmem:[#allocation2 + $0x68] sm:$0xff]
    %v92 = vld [vmem:[#allocation2 + $0x70] sm:$0xff]
    %v93 = vld [vmem:[#allocation2 + $0x78] sm:$0xff]
    %v94 = vld [vmem:[#allocation2 + $0x80] sm:$0xff]
    %v95 = vld [vmem:[#allocation2 + $0x88] sm:$0xff]
    %v96 = vld [vmem:[#allocation2 + $0x90] sm:$0xff]
    %v97 = vld [vmem:[#allocation2 + $0x98] sm:$0xff]
    %v98 = vld [vmem:[#allocation2 + $0xa0] sm:$0xff]
    %v99 = vld [vmem:[#allocation2 + $0xa8] sm:$0xff]
    %v100 = vld [vmem:[#allocation2 + $0xb0] sm:$0xff]
    %v101 = vld [vmem:[#allocation2 + $0xb8] sm:$0xff]
    %v102 = vld [vmem:[#allocation2 + $0xc0] sm:$0xff]
    %v103 = vld [vmem:[#allocation2 + $0xc8] sm:$0xff]
    %v104 = vld [vmem:[#allocation2 + $0xd0] sm:$0xff]
    %v105 = vld [vmem:[#allocation2 + $0xd8] sm:$0xff]
    %v106 = vld [vmem:[#allocation2 + $0xe0] sm:$0xff]
    %v107 = vld [vmem:[#allocation2 + $0xe8] sm:$0xff]
    %v108 = vld [vmem:[#allocation2 + $0xf0] sm:$0xff]
    %v109 = vld [vmem:[#allocation2 + $0xf8] sm:$0xff]
    %v112 = vunpack.c.l.b16 %v76
    %v113 = vunpack.c.h.b16 %v76
    %v114 = vunpack.c.l.b16 %v77
    %v115 = vunpack.c.h.b16 %v77
    %v116 = vpack.c.b16 %v114, %v112
    %v117 = vpack.c.b16 %v115, %v113
    %v152 = vunpack.c.l.b16 %v78
    %v153 = vunpack.c.h.b16 %v78
    %v154 = vunpack.c.l.b16 %v79
    %v155 = vunpack.c.h.b16 %v79
    %v156 = vunpack.c.l.b16 %v80
    %v157 = vunpack.c.h.b16 %v80
    %v158 = vunpack.c.l.b16 %v81
    %v159 = vunpack.c.h.b16 %v81
    %v160 = vunpack.c.l.b16 %v82
    %v161 = vunpack.c.h.b16 %v82
    %v162 = vunpack.c.l.b16 %v83
    %v163 = vunpack.c.h.b16 %v83
    %v164 = vunpack.c.l.b16 %v84
    %v165 = vunpack.c.h.b16 %v84
    %v166 = vunpack.c.l.b16 %v85
    %v167 = vunpack.c.h.b16 %v85
    %v168 = vunpack.c.l.b16 %v86
    %v169 = vunpack.c.h.b16 %v86
    %v170 = vunpack.c.l.b16 %v87
    %v171 = vunpack.c.h.b16 %v87
    %v172 = vunpack.c.l.b16 %v88
    %v173 = vunpack.c.h.b16 %v88
    %v174 = vunpack.c.l.b16 %v89
    %v175 = vunpack.c.h.b16 %v89
    %v176 = vunpack.c.l.b16 %v90
    %v177 = vunpack.c.h.b16 %v90
    %v178 = vunpack.c.l.b16 %v91
    %v179 = vunpack.c.h.b16 %v91
    %v180 = vunpack.c.l.b16 %v92
    %v181 = vunpack.c.h.b16 %v92
    %v182 = vunpack.c.l.b16 %v93
    %v183 = vunpack.c.h.b16 %v93
    %v184 = vunpack.c.l.b16 %v94
    %v185 = vunpack.c.h.b16 %v94
    %v186 = vunpack.c.l.b16 %v95
    %v187 = vunpack.c.h.b16 %v95
    %v188 = vunpack.c.l.b16 %v96
    %v189 = vunpack.c.h.b16 %v96
    %v190 = vunpack.c.l.b16 %v97
    %v191 = vunpack.c.h.b16 %v97
    %v192 = vunpack.c.l.b16 %v98
    %v193 = vunpack.c.h.b16 %v98
    %v194 = vunpack.c.l.b16 %v99
    %v195 = vunpack.c.h.b16 %v99
    %v196 = vunpack.c.l.b16 %v100
    %v197 = vunpack.c.h.b16 %v100
    %v198 = vunpack.c.l.b16 %v101
    %v199 = vunpack.c.h.b16 %v101
    %v200 = vunpack.c.l.b16 %v102
    %v201 = vunpack.c.h.b16 %v102
    %v202 = vunpack.c.l.b16 %v103
    %v203 = vunpack.c.h.b16 %v103
    %v204 = vunpack.c.l.b16 %v104
    %v205 = vunpack.c.h.b16 %v104
    %v206 = vunpack.c.l.b16 %v105
    %v207 = vunpack.c.h.b16 %v105
    %v208 = vunpack.c.l.b16 %v106
    %v209 = vunpack.c.h.b16 %v106
    %v210 = vunpack.c.l.b16 %v107
    %v211 = vunpack.c.h.b16 %v107
    %v212 = vunpack.c.l.b16 %v108
    %v213 = vunpack.c.h.b16 %v108
    %v214 = vunpack.c.l.b16 %v109
    %v215 = vunpack.c.h.b16 %v109
    %v216 = vpack.c.b16 %v154, %v152
    %v217 = vpack.c.b16 %v155, %v153
    %v218 = vpack.c.b16 %v158, %v156
    %v219 = vpack.c.b16 %v159, %v157
    %v220 = vpack.c.b16 %v162, %v160
    %v221 = vpack.c.b16 %v163, %v161
    %v222 = vpack.c.b16 %v166, %v164
    %v223 = vpack.c.b16 %v167, %v165
    %v224 = vpack.c.b16 %v170, %v168
    %v225 = vpack.c.b16 %v171, %v169
    %v226 = vpack.c.b16 %v174, %v172
    %v227 = vpack.c.b16 %v175, %v173
    %v228 = vpack.c.b16 %v178, %v176
    %v229 = vpack.c.b16 %v179, %v177
    %v230 = vpack.c.b16 %v182, %v180
    %v231 = vpack.c.b16 %v183, %v181
    %v232 = vpack.c.b16 %v186, %v184
    %v233 = vpack.c.b16 %v187, %v185
    %v234 = vpack.c.b16 %v190, %v188
    %v235 = vpack.c.b16 %v191, %v189
    %v236 = vpack.c.b16 %v194, %v192
    %v237 = vpack.c.b16 %v195, %v193
    %v238 = vpack.c.b16 %v198, %v196
    %v239 = vpack.c.b16 %v199, %v197
    %v240 = vpack.c.b16 %v202, %v200
    %v241 = vpack.c.b16 %v203, %v201
    %v242 = vpack.c.b16 %v206, %v204
    %v243 = vpack.c.b16 %v207, %v205
    %v244 = vpack.c.b16 %v210, %v208
    %v245 = vpack.c.b16 %v211, %v209
    %v246 = vpack.c.b16 %v214, %v212
    %v247 = vpack.c.b16 %v215, %v213
    %280 = vmatprep.subr.bf16.mxu0 %v217
    %281 = vmatpush1.bf16.msra.mxu0 %v216
    %282 = vmatprep.subr.bf16.mxu0 %v219
    %283 = vmatpush1.bf16.msra.mxu0 %v218
    %284 = vmatprep.subr.bf16.mxu0 %v221
    %285 = vmatpush1.bf16.msra.mxu0 %v220
    %286 = vmatprep.subr.bf16.mxu0 %v223
    %287 = vmatpush1.bf16.msra.mxu0 %v222
    %288 = vmatprep.subr.bf16.mxu0 %v225
    %289 = vmatpush1.bf16.msra.mxu0 %v224
    %290 = vmatprep.subr.bf16.mxu0 %v227
    %291 = vmatpush1.bf16.msra.mxu0 %v226
    %292 = vmatprep.subr.bf16.mxu0 %v229
    %293 = vmatpush1.bf16.msra.mxu0 %v228
    %294 = vmatprep.subr.bf16.mxu0 %v231
    %295 = vmatpush1.bf16.msra.mxu0 %v230
    %296 = vmatprep.subr.bf16.mxu0 %v233
    %297 = vmatpush1.bf16.msra.mxu0 %v232
    %298 = vmatprep.subr.bf16.mxu0 %v235
    %299 = vmatpush1.bf16.msra.mxu0 %v234
    %300 = vmatprep.subr.bf16.mxu0 %v237
    %301 = vmatpush1.bf16.msra.mxu0 %v236
    %302 = vmatprep.subr.bf16.mxu0 %v239
    %303 = vmatpush1.bf16.msra.mxu0 %v238
    %304 = vmatprep.subr.bf16.mxu0 %v241
    %305 = vmatpush1.bf16.msra.mxu0 %v240
    %306 = vmatprep.subr.bf16.mxu0 %v243
    %307 = vmatpush1.bf16.msra.mxu0 %v242
    %308 = vmatprep.subr.bf16.mxu0 %v245
    %309 = vmatpush1.bf16.msra.mxu0 %v244
    %310 = vmatprep.subr.bf16.mxu0 %v247
    %311 = vmatpush1.bf16.msra.mxu0 %v246
    %312 = vmatprep.mubr.bf16.mxu0 %v117
    %313 = vmatmul.mubr.bf16.gmra.mrb[0].mxu0 %v116
    %v314 = vpop.f32.mrb[0].mxu0
    %v315 = vadd.f32 0.0, %v314
    %v316 = vpop.f32.mrb[0].mxu0
    %v317 = vadd.f32 0.0, %v316
    %v318 = vpop.f32.mrb[0].mxu0
    %v319 = vadd.f32 0.0, %v318
    %v320 = vpop.f32.mrb[0].mxu0
    %v321 = vadd.f32 0.0, %v320
    %322 = vdwg.mxu0
    %v323 = vld [vmem:[%s2] sm:$0x3]
    %v324 = vld [vmem:[%s3] sm:$0x3]
    %v325 = vadd.f32 %v315, %v319
    %v326 = vrot.slane %v325, 4
    %v327 = vadd.f32 %v325, %v326
    %v328 = vrot.slane %v327, 2
    %v329 = vadd.f32 %v327, %v328
    %v330 = vrot.slane %v329, 1
    %v331 = vadd.f32 %v329, %v330
    %v332 = vadd.f32 %v317, %v321
    %v333 = vrot.slane %v332, 4
    %v334 = vadd.f32 %v332, %v333
    %v335 = vrot.slane %v334, 2
    %v336 = vadd.f32 %v334, %v335
    %v337 = vrot.slane %v336, 1
    %v338 = vadd.f32 %v336, %v337
    %v339 = vmul.f32 %v331, 0.125
    %v340 = vmul.f32 %v338, 0.125
    %v341 = vsub.f32 %v315, %v339
    %v342 = vsub.f32 %v317, %v340
    %v343 = vsub.f32 %v319, %v339
    %v344 = vsub.f32 %v321, %v340
    %v345 = vlaneseq
    %v346 = vshrl.u32 %v345, 7
    %v347 = vadd.s32 %v346, 8
    %vm348 = vcmp.lt.s32.totalorder %v346, 8
    %vm349 = vcmp.lt.s32.totalorder %v347, 8
    %v350 = vsel %vm348, %v341, 0.0
    %v351 = vsel %vm348, %v342, 0.0
    %v352 = vsel %vm349, %v343, 0.0
    %v353 = vsel %vm349, %v344, 0.0
    %v354 = vmul.f32 %v350, %v350
    %v355 = vmul.f32 %v351, %v351
    %v356 = vmul.f32 %v352, %v352
    %v357 = vmul.f32 %v353, %v353
    %v358 = vadd.f32 %v354, %v356
    %v359 = vrot.slane %v358, 4
    %v360 = vadd.f32 %v358, %v359
    %v361 = vrot.slane %v360, 2
    %v362 = vadd.f32 %v360, %v361
    %v363 = vrot.slane %v362, 1
    %v364 = vadd.f32 %v362, %v363
    %v365 = vadd.f32 %v355, %v357
    %v366 = vrot.slane %v365, 4
    %v367 = vadd.f32 %v365, %v366
    %v368 = vrot.slane %v367, 2
    %v369 = vadd.f32 %v367, %v368
    %v370 = vrot.slane %v369, 1
    %v371 = vadd.f32 %v369, %v370
    %v372 = vmul.f32 %v364, 0.125
    %v373 = vmul.f32 %v371, 0.125
    %v374 = vadd.f32 %v372, 1e-05
    %v375 = vadd.f32 %v373, 1e-05
    %v376 = vrsqrt.pop %v374
    %v377 = vrsqrt.pop %v375
    %v380 = vcombine.low %v376, %v377
    %v382 = vunpack.c.l.s4 1966171168
    %v383 = vunpack.c.0.s8 %v382
    %v384 = vlaneseq
    %v385 = vshrl.u32 %v384, 7
    %v386 = vsub.s32 %v383, %v385
    %v387 = vrot.slane %v380, %v386
    %v389 = vunpack.c.l.s4 1966171168
    %v390 = vunpack.c.0.s8 %v389
    %v391 = vlaneseq
    %v392 = vshrl.u32 %v391, 7
    %v393 = vsub.s32 %v390, %v392
    %v394 = vrot.slane %v387, %v393
    %v396 = vmul.f32 %v323, %v394
    %v398 = vlaneseq
    %v399 = vshrl.u32 %v398, 7
    %v400 = vsub.s32 0, %v399
    %v401 = vrot.slane %v396, %v400
    %v402 = vlaneseq
    %v403 = vshrl.u32 %v402, 7
    %v404 = vsub.s32 1, %v403
    %v405 = vrot.slane %v396, %v404
    %v408 = vmul.f32 %v350, %v401
    %v409 = vmul.f32 %v351, %v405
    %v410 = vmul.f32 %v352, %v401
    %v411 = vmul.f32 %v353, %v405
    %v413 = vlaneseq
    %v414 = vshrl.u32 %v413, 7
    %v415 = vsub.s32 0, %v414
    %v416 = vrot.slane %v324, %v415
    %v417 = vlaneseq
    %v418 = vshrl.u32 %v417, 7
    %v419 = vsub.s32 1, %v418
    %v420 = vrot.slane %v324, %v419
    %v423 = vadd.f32 %v408, %v416
    %v424 = vadd.f32 %v409, %v420
    %v425 = vadd.f32 %v410, %v416
    %v426 = vadd.f32 %v411, %v420
    %v427 = vmax.f32 %v423, 0.0
    %v428 = vmax.f32 %v424, 0.0
    %v429 = vmax.f32 %v425, 0.0
    %v430 = vmax.f32 %v426, 0.0
    %v431 = vsel %vm348, %v427, 0.0
    %v432 = vsel %vm348, %v428, 0.0
    %v433 = vsel %vm349, %v429, 0.0
    %v434 = vsel %vm349, %v430, 0.0
    %v435 = vpack.c.bf16 %v433, %v431
    %v436 = vpack.c.bf16 %v434, %v432
    %v437 = vld [vmem:[#allocation4] sm:$0xff]
    %v438 = vld [vmem:[#allocation4 + $0x8] sm:$0xff]
    %v439 = vld [vmem:[#allocation4 + $0x10] sm:$0xff]
    %v440 = vld [vmem:[#allocation4 + $0x18] sm:$0xff]
    %v441 = vld [vmem:[#allocation4 + $0x20] sm:$0xff]
    %v442 = vld [vmem:[#allocation4 + $0x28] sm:$0xff]
    %v443 = vld [vmem:[#allocation4 + $0x30] sm:$0xff]
    %v444 = vld [vmem:[#allocation4 + $0x38] sm:$0xff]
    %v445 = vld [vmem:[#allocation4 + $0x40] sm:$0xff]
    %v446 = vld [vmem:[#allocation4 + $0x48] sm:$0xff]
    %v447 = vld [vmem:[#allocation4 + $0x50] sm:$0xff]
    %v448 = vld [vmem:[#allocation4 + $0x58] sm:$0xff]
    %v449 = vld [vmem:[#allocation4 + $0x60] sm:$0xff]
    %v450 = vld [vmem:[#allocation4 + $0x68] sm:$0xff]
    %v451 = vld [vmem:[#allocation4 + $0x70] sm:$0xff]
    %v452 = vld [vmem:[#allocation4 + $0x78] sm:$0xff]
    %v453 = vld [vmem:[#allocation4 + $0x80] sm:$0xff]
    %v454 = vld [vmem:[#allocation4 + $0x88] sm:$0xff]
    %v455 = vld [vmem:[#allocation4 + $0x90] sm:$0xff]
    %v456 = vld [vmem:[#allocation4 + $0x98] sm:$0xff]
    %v457 = vld [vmem:[#allocation4 + $0xa0] sm:$0xff]
    %v458 = vld [vmem:[#allocation4 + $0xa8] sm:$0xff]
    %v459 = vld [vmem:[#allocation4 + $0xb0] sm:$0xff]
    %v460 = vld [vmem:[#allocation4 + $0xb8] sm:$0xff]
    %v461 = vld [vmem:[#allocation4 + $0xc0] sm:$0xff]
    %v462 = vld [vmem:[#allocation4 + $0xc8] sm:$0xff]
    %v463 = vld [vmem:[#allocation4 + $0xd0] sm:$0xff]
    %v464 = vld [vmem:[#allocation4 + $0xd8] sm:$0xff]
    %v465 = vld [vmem:[#allocation4 + $0xe0] sm:$0xff]
    %v466 = vld [vmem:[#allocation4 + $0xe8] sm:$0xff]
    %v467 = vld [vmem:[#allocation4 + $0xf0] sm:$0xff]
    %v468 = vld [vmem:[#allocation4 + $0xf8] sm:$0xff]
    %v501 = vunpack.c.l.b16 %v437
    %v502 = vunpack.c.h.b16 %v437
    %v503 = vunpack.c.l.b16 %v438
    %v504 = vunpack.c.h.b16 %v438
    %v505 = vunpack.c.l.b16 %v439
    %v506 = vunpack.c.h.b16 %v439
    %v507 = vunpack.c.l.b16 %v440
    %v508 = vunpack.c.h.b16 %v440
    %v509 = vunpack.c.l.b16 %v441
    %v510 = vunpack.c.h.b16 %v441
    %v511 = vunpack.c.l.b16 %v442
    %v512 = vunpack.c.h.b16 %v442
    %v513 = vunpack.c.l.b16 %v443
    %v514 = vunpack.c.h.b16 %v443
    %v515 = vunpack.c.l.b16 %v444
    %v516 = vunpack.c.h.b16 %v444
    %v517 = vunpack.c.l.b16 %v445
    %v518 = vunpack.c.h.b16 %v445
    %v519 = vunpack.c.l.b16 %v446
    %v520 = vunpack.c.h.b16 %v446
    %v521 = vunpack.c.l.b16 %v447
    %v522 = vunpack.c.h.b16 %v447
    %v523 = vunpack.c.l.b16 %v448
    %v524 = vunpack.c.h.b16 %v448
    %v525 = vunpack.c.l.b16 %v449
    %v526 = vunpack.c.h.b16 %v449
    %v527 = vunpack.c.l.b16 %v450
    %v528 = vunpack.c.h.b16 %v450
    %v529 = vunpack.c.l.b16 %v451
    %v530 = vunpack.c.h.b16 %v451
    %v531 = vunpack.c.l.b16 %v452
    %v532 = vunpack.c.h.b16 %v452
    %v533 = vunpack.c.l.b16 %v453
    %v534 = vunpack.c.h.b16 %v453
    %v535 = vunpack.c.l.b16 %v454
    %v536 = vunpack.c.h.b16 %v454
    %v537 = vunpack.c.l.b16 %v455
    %v538 = vunpack.c.h.b16 %v455
    %v539 = vunpack.c.l.b16 %v456
    %v540 = vunpack.c.h.b16 %v456
    %v541 = vunpack.c.l.b16 %v457
    %v542 = vunpack.c.h.b16 %v457
    %v543 = vunpack.c.l.b16 %v458
    %v544 = vunpack.c.h.b16 %v458
    %v545 = vunpack.c.l.b16 %v459
    %v546 = vunpack.c.h.b16 %v459
    %v547 = vunpack.c.l.b16 %v460
    %v548 = vunpack.c.h.b16 %v460
    %v549 = vunpack.c.l.b16 %v461
    %v550 = vunpack.c.h.b16 %v461
    %v551 = vunpack.c.l.b16 %v462
    %v552 = vunpack.c.h.b16 %v462
    %v553 = vunpack.c.l.b16 %v463
    %v554 = vunpack.c.h.b16 %v463
    %v555 = vunpack.c.l.b16 %v464
    %v556 = vunpack.c.h.b16 %v464
    %v557 = vunpack.c.l.b16 %v465
    %v558 = vunpack.c.h.b16 %v465
    %v559 = vunpack.c.l.b16 %v466
    %v560 = vunpack.c.h.b16 %v466
    %v561 = vunpack.c.l.b16 %v467
    %v562 = vunpack.c.h.b16 %v467
    %v563 = vunpack.c.l.b16 %v468
    %v564 = vunpack.c.h.b16 %v468
    %v565 = vpack.c.b16 %v503, %v501
    %v566 = vpack.c.b16 %v504, %v502
    %v567 = vpack.c.b16 %v507, %v505
    %v568 = vpack.c.b16 %v508, %v506
    %v569 = vpack.c.b16 %v511, %v509
    %v570 = vpack.c.b16 %v512, %v510
    %v571 = vpack.c.b16 %v515, %v513
    %v572 = vpack.c.b16 %v516, %v514
    %v573 = vpack.c.b16 %v519, %v517
    %v574 = vpack.c.b16 %v520, %v518
    %v575 = vpack.c.b16 %v523, %v521
    %v576 = vpack.c.b16 %v524, %v522
    %v577 = vpack.c.b16 %v527, %v525
    %v578 = vpack.c.b16 %v528, %v526
    %v579 = vpack.c.b16 %v531, %v529
    %v580 = vpack.c.b16 %v532, %v530
    %v581 = vpack.c.b16 %v535, %v533
    %v582 = vpack.c.b16 %v536, %v534
    %v583 = vpack.c.b16 %v539, %v537
    %v584 = vpack.c.b16 %v540, %v538
    %v585 = vpack.c.b16 %v543, %v541
    %v586 = vpack.c.b16 %v544, %v542
    %v587 = vpack.c.b16 %v547, %v545
    %v588 = vpack.c.b16 %v548, %v546
    %v589 = vpack.c.b16 %v551, %v549
    %v590 = vpack.c.b16 %v552, %v550
    %v591 = vpack.c.b16 %v555, %v553
    %v592 = vpack.c.b16 %v556, %v554
    %v593 = vpack.c.b16 %v559, %v557
    %v594 = vpack.c.b16 %v560, %v558
    %v595 = vpack.c.b16 %v563, %v561
    %v596 = vpack.c.b16 %v564, %v562
    %629 = vmatprep.subr.bf16.mxu0 %v566
    %630 = vmatpush1.bf16.msra.mxu0 %v565
    %631 = vmatprep.subr.bf16.mxu0 %v568
    %632 = vmatpush1.bf16.msra.mxu0 %v567
    %633 = vmatprep.subr.bf16.mxu0 %v570
    %634 = vmatpush1.bf16.msra.mxu0 %v569
    %635 = vmatprep.subr.bf16.mxu0 %v572
    %636 = vmatpush1.bf16.msra.mxu0 %v571
    %637 = vmatprep.subr.bf16.mxu0 %v574
    %638 = vmatpush1.bf16.msra.mxu0 %v573
    %639 = vmatprep.subr.bf16.mxu0 %v576
    %640 = vmatpush1.bf16.msra.mxu0 %v575
    %641 = vmatprep.subr.bf16.mxu0 %v578
    %642 = vmatpush1.bf16.msra.mxu0 %v577
    %643 = vmatprep.subr.bf16.mxu0 %v580
    %644 = vmatpush1.bf16.msra.mxu0 %v579
    %645 = vmatprep.subr.bf16.mxu0 %v582
    %646 = vmatpush1.bf16.msra.mxu0 %v581
    %647 = vmatprep.subr.bf16.mxu0 %v584
    %648 = vmatpush1.bf16.msra.mxu0 %v583
    %649 = vmatprep.subr.bf16.mxu0 %v586
    %650 = vmatpush1.bf16.msra.mxu0 %v585
    %651 = vmatprep.subr.bf16.mxu0 %v588
    %652 = vmatpush1.bf16.msra.mxu0 %v587
    %653 = vmatprep.subr.bf16.mxu0 %v590
    %654 = vmatpush1.bf16.msra.mxu0 %v589
    %655 = vmatprep.subr.bf16.mxu0 %v592
    %656 = vmatpush1.bf16.msra.mxu0 %v591
    %657 = vmatprep.subr.bf16.mxu0 %v594
    %658 = vmatpush1.bf16.msra.mxu0 %v593
    %659 = vmatprep.subr.bf16.mxu0 %v596
    %660 = vmatpush1.bf16.msra.mxu0 %v595
    %661 = vmatprep.mubr.bf16.mxu0 %v436
    %662 = vmatmul.mubr.bf16.gmra.mrb[0].mxu0 %v435
    %v663 = vpop.f32.mrb[0].mxu0
    %v664 = vadd.f32 0.0, %v663
    %v665 = vpop.f32.mrb[0].mxu0
    %v666 = vadd.f32 0.0, %v665
    %v667 = vpop.f32.mrb[0].mxu0
    %v668 = vadd.f32 0.0, %v667
    %v669 = vpop.f32.mrb[0].mxu0
    %v670 = vadd.f32 0.0, %v669
    %671 = vdwg.mxu0
    %v672 = vld [vmem:[%s5] sm:$0x3]
    %v673 = vld [vmem:[%s6] sm:$0x3]
    %v674 = vadd.f32 %v664, %v668
    %v675 = vrot.slane %v674, 4
    %v676 = vadd.f32 %v674, %v675
    %v677 = vrot.slane %v676, 2
    %v678 = vadd.f32 %v676, %v677
    %v679 = vrot.slane %v678, 1
    %v680 = vadd.f32 %v678, %v679
    %v681 = vadd.f32 %v666, %v670
    %v682 = vrot.slane %v681, 4
    %v683 = vadd.f32 %v681, %v682
    %v684 = vrot.slane %v683, 2
    %v685 = vadd.f32 %v683, %v684
    %v686 = vrot.slane %v685, 1
    %v687 = vadd.f32 %v685, %v686
    %v688 = vmul.f32 %v680, 0.125
    %v689 = vmul.f32 %v687, 0.125
    %v690 = vsub.f32 %v664, %v688
    %v691 = vsub.f32 %v666, %v689
    %v692 = vsub.f32 %v668, %v688
    %v693 = vsub.f32 %v670, %v689
    %v694 = vsel %vm348, %v690, 0.0
    %v695 = vsel %vm348, %v691, 0.0
    %v696 = vsel %vm349, %v692, 0.0
    %v697 = vsel %vm349, %v693, 0.0
    %v698 = vmul.f32 %v694, %v694
    %v699 = vmul.f32 %v695, %v695
    %v700 = vmul.f32 %v696, %v696
    %v701 = vmul.f32 %v697, %v697
    %v702 = vadd.f32 %v698, %v700
    %v703 = vrot.slane %v702, 4
    %v704 = vadd.f32 %v702, %v703
    %v705 = vrot.slane %v704, 2
    %v706 = vadd.f32 %v704, %v705
    %v707 = vrot.slane %v706, 1
    %v708 = vadd.f32 %v706, %v707
    %v709 = vadd.f32 %v699, %v701
    %v710 = vrot.slane %v709, 4
    %v711 = vadd.f32 %v709, %v710
    %v712 = vrot.slane %v711, 2
    %v713 = vadd.f32 %v711, %v712
    %v714 = vrot.slane %v713, 1
    %v715 = vadd.f32 %v713, %v714
    %v716 = vmul.f32 %v708, 0.125
    %v717 = vmul.f32 %v715, 0.125
    %v718 = vadd.f32 %v716, 1e-05
    %v719 = vadd.f32 %v717, 1e-05
    %v720 = vrsqrt.pop %v718
    %v721 = vrsqrt.pop %v719
    %v724 = vcombine.low %v720, %v721
    %v726 = vunpack.c.l.s4 1966171168
    %v727 = vunpack.c.0.s8 %v726
    %v728 = vlaneseq
    %v729 = vshrl.u32 %v728, 7
    %v730 = vsub.s32 %v727, %v729
    %v731 = vrot.slane %v724, %v730
    %v733 = vunpack.c.l.s4 1966171168
    %v734 = vunpack.c.0.s8 %v733
    %v735 = vlaneseq
    %v736 = vshrl.u32 %v735, 7
    %v737 = vsub.s32 %v734, %v736
    %v738 = vrot.slane %v731, %v737
    %v740 = vmul.f32 %v672, %v738
    %v742 = vlaneseq
    %v743 = vshrl.u32 %v742, 7
    %v744 = vsub.s32 0, %v743
    %v745 = vrot.slane %v740, %v744
    %v746 = vlaneseq
    %v747 = vshrl.u32 %v746, 7
    %v748 = vsub.s32 1, %v747
    %v749 = vrot.slane %v740, %v748
    %v752 = vmul.f32 %v694, %v745
    %v753 = vmul.f32 %v695, %v749
    %v754 = vmul.f32 %v696, %v745
    %v755 = vmul.f32 %v697, %v749
    %v757 = vlaneseq
    %v758 = vshrl.u32 %v757, 7
    %v759 = vsub.s32 0, %v758
    %v760 = vrot.slane %v673, %v759
    %v761 = vlaneseq
    %v762 = vshrl.u32 %v761, 7
    %v763 = vsub.s32 1, %v762
    %v764 = vrot.slane %v673, %v763
    %v767 = vadd.f32 %v752, %v760
    %v768 = vadd.f32 %v753, %v764
    %v769 = vadd.f32 %v754, %v760
    %v770 = vadd.f32 %v755, %v764
    %v771 = vmax.f32 %v767, 0.0
    %v772 = vmax.f32 %v768, 0.0
    %v773 = vmax.f32 %v769, 0.0
    %v774 = vmax.f32 %v770, 0.0
    %v775 = vsel %vm348, %v771, 0.0
    %v776 = vsel %vm348, %v772, 0.0
    %v777 = vsel %vm349, %v773, 0.0
    %v778 = vsel %vm349, %v774, 0.0
    %v779 = vpack.c.bf16 %v777, %v775
    %v780 = vpack.c.bf16 %v778, %v776
    %v781 = vld [vmem:[#allocation6] sm:$0xff]
    %v782 = vld [vmem:[#allocation6 + $0x8] sm:$0xff]
    %v783 = vld [vmem:[#allocation6 + $0x10] sm:$0xff]
    %v784 = vld [vmem:[#allocation6 + $0x18] sm:$0xff]
    %v785 = vld [vmem:[#allocation6 + $0x20] sm:$0xff]
    %v786 = vld [vmem:[#allocation6 + $0x28] sm:$0xff]
    %v787 = vld [vmem:[#allocation6 + $0x30] sm:$0xff]
    %v788 = vld [vmem:[#allocation6 + $0x38] sm:$0xff]
    %v789 = vld [vmem:[#allocation6 + $0x40] sm:$0xff]
    %v790 = vld [vmem:[#allocation6 + $0x48] sm:$0xff]
    %v791 = vld [vmem:[#allocation6 + $0x50] sm:$0xff]
    %v792 = vld [vmem:[#allocation6 + $0x58] sm:$0xff]
    %v793 = vld [vmem:[#allocation6 + $0x60] sm:$0xff]
    %v794 = vld [vmem:[#allocation6 + $0x68] sm:$0xff]
    %v795 = vld [vmem:[#allocation6 + $0x70] sm:$0xff]
    %v796 = vld [vmem:[#allocation6 + $0x78] sm:$0xff]
    %v797 = vld [vmem:[#allocation6 + $0x80] sm:$0xff]
    %v798 = vld [vmem:[#allocation6 + $0x88] sm:$0xff]
    %v799 = vld [vmem:[#allocation6 + $0x90] sm:$0xff]
    %v800 = vld [vmem:[#allocation6 + $0x98] sm:$0xff]
    %v801 = vld [vmem:[#allocation6 + $0xa0] sm:$0xff]
    %v802 = vld [vmem:[#allocation6 + $0xa8] sm:$0xff]
    %v803 = vld [vmem:[#allocation6 + $0xb0] sm:$0xff]
    %v804 = vld [vmem:[#allocation6 + $0xb8] sm:$0xff]
    %v805 = vld [vmem:[#allocation6 + $0xc0] sm:$0xff]
    %v806 = vld [vmem:[#allocation6 + $0xc8] sm:$0xff]
    %v807 = vld [vmem:[#allocation6 + $0xd0] sm:$0xff]
    %v808 = vld [vmem:[#allocation6 + $0xd8] sm:$0xff]
    %v809 = vld [vmem:[#allocation6 + $0xe0] sm:$0xff]
    %v810 = vld [vmem:[#allocation6 + $0xe8] sm:$0xff]
    %v811 = vld [vmem:[#allocation6 + $0xf0] sm:$0xff]
    %v812 = vld [vmem:[#allocation6 + $0xf8] sm:$0xff]
    %v845 = vunpack.c.l.b16 %v781
    %v846 = vunpack.c.h.b16 %v781
    %v847 = vunpack.c.l.b16 %v782
    %v848 = vunpack.c.h.b16 %v782
    %v849 = vunpack.c.l.b16 %v783
    %v850 = vunpack.c.h.b16 %v783
    %v851 = vunpack.c.l.b16 %v784
    %v852 = vunpack.c.h.b16 %v784
    %v853 = vunpack.c.l.b16 %v785
    %v854 = vunpack.c.h.b16 %v785
    %v855 = vunpack.c.l.b16 %v786
    %v856 = vunpack.c.h.b16 %v786
    %v857 = vunpack.c.l.b16 %v787
    %v858 = vunpack.c.h.b16 %v787
    %v859 = vunpack.c.l.b16 %v788
    %v860 = vunpack.c.h.b16 %v788
    %v861 = vunpack.c.l.b16 %v789
    %v862 = vunpack.c.h.b16 %v789
    %v863 = vunpack.c.l.b16 %v790
    %v864 = vunpack.c.h.b16 %v790
    %v865 = vunpack.c.l.b16 %v791
    %v866 = vunpack.c.h.b16 %v791
    %v867 = vunpack.c.l.b16 %v792
    %v868 = vunpack.c.h.b16 %v792
    %v869 = vunpack.c.l.b16 %v793
    %v870 = vunpack.c.h.b16 %v793
    %v871 = vunpack.c.l.b16 %v794
    %v872 = vunpack.c.h.b16 %v794
    %v873 = vunpack.c.l.b16 %v795
    %v874 = vunpack.c.h.b16 %v795
    %v875 = vunpack.c.l.b16 %v796
    %v876 = vunpack.c.h.b16 %v796
    %v877 = vunpack.c.l.b16 %v797
    %v878 = vunpack.c.h.b16 %v797
    %v879 = vunpack.c.l.b16 %v798
    %v880 = vunpack.c.h.b16 %v798
    %v881 = vunpack.c.l.b16 %v799
    %v882 = vunpack.c.h.b16 %v799
    %v883 = vunpack.c.l.b16 %v800
    %v884 = vunpack.c.h.b16 %v800
    %v885 = vunpack.c.l.b16 %v801
    %v886 = vunpack.c.h.b16 %v801
    %v887 = vunpack.c.l.b16 %v802
    %v888 = vunpack.c.h.b16 %v802
    %v889 = vunpack.c.l.b16 %v803
    %v890 = vunpack.c.h.b16 %v803
    %v891 = vunpack.c.l.b16 %v804
    %v892 = vunpack.c.h.b16 %v804
    %v893 = vunpack.c.l.b16 %v805
    %v894 = vunpack.c.h.b16 %v805
    %v895 = vunpack.c.l.b16 %v806
    %v896 = vunpack.c.h.b16 %v806
    %v897 = vunpack.c.l.b16 %v807
    %v898 = vunpack.c.h.b16 %v807
    %v899 = vunpack.c.l.b16 %v808
    %v900 = vunpack.c.h.b16 %v808
    %v901 = vunpack.c.l.b16 %v809
    %v902 = vunpack.c.h.b16 %v809
    %v903 = vunpack.c.l.b16 %v810
    %v904 = vunpack.c.h.b16 %v810
    %v905 = vunpack.c.l.b16 %v811
    %v906 = vunpack.c.h.b16 %v811
    %v907 = vunpack.c.l.b16 %v812
    %v908 = vunpack.c.h.b16 %v812
    %v909 = vpack.c.b16 %v847, %v845
    %v910 = vpack.c.b16 %v848, %v846
    %v911 = vpack.c.b16 %v851, %v849
    %v912 = vpack.c.b16 %v852, %v850
    %v913 = vpack.c.b16 %v855, %v853
    %v914 = vpack.c.b16 %v856, %v854
    %v915 = vpack.c.b16 %v859, %v857
    %v916 = vpack.c.b16 %v860, %v858
    %v917 = vpack.c.b16 %v863, %v861
    %v918 = vpack.c.b16 %v864, %v862
    %v919 = vpack.c.b16 %v867, %v865
    %v920 = vpack.c.b16 %v868, %v866
    %v921 = vpack.c.b16 %v871, %v869
    %v922 = vpack.c.b16 %v872, %v870
    %v923 = vpack.c.b16 %v875, %v873
    %v924 = vpack.c.b16 %v876, %v874
    %v925 = vpack.c.b16 %v879, %v877
    %v926 = vpack.c.b16 %v880, %v878
    %v927 = vpack.c.b16 %v883, %v881
    %v928 = vpack.c.b16 %v884, %v882
    %v929 = vpack.c.b16 %v887, %v885
    %v930 = vpack.c.b16 %v888, %v886
    %v931 = vpack.c.b16 %v891, %v889
    %v932 = vpack.c.b16 %v892, %v890
    %v933 = vpack.c.b16 %v895, %v893
    %v934 = vpack.c.b16 %v896, %v894
    %v935 = vpack.c.b16 %v899, %v897
    %v936 = vpack.c.b16 %v900, %v898
    %v937 = vpack.c.b16 %v903, %v901
    %v938 = vpack.c.b16 %v904, %v902
    %v939 = vpack.c.b16 %v907, %v905
    %v940 = vpack.c.b16 %v908, %v906
    %973 = vmatprep.subr.bf16.mxu0 %v910
    %974 = vmatpush1.bf16.msra.mxu0 %v909
    %975 = vmatprep.subr.bf16.mxu0 %v912
    %976 = vmatpush1.bf16.msra.mxu0 %v911
    %977 = vmatprep.subr.bf16.mxu0 %v914
    %978 = vmatpush1.bf16.msra.mxu0 %v913
    %979 = vmatprep.subr.bf16.mxu0 %v916
    %980 = vmatpush1.bf16.msra.mxu0 %v915
    %981 = vmatprep.subr.bf16.mxu0 %v918
    %982 = vmatpush1.bf16.msra.mxu0 %v917
    %983 = vmatprep.subr.bf16.mxu0 %v920
    %984 = vmatpush1.bf16.msra.mxu0 %v919
    %985 = vmatprep.subr.bf16.mxu0 %v922
    %986 = vmatpush1.bf16.msra.mxu0 %v921
    %987 = vmatprep.subr.bf16.mxu0 %v924
    %988 = vmatpush1.bf16.msra.mxu0 %v923
    %989 = vmatprep.subr.bf16.mxu0 %v926
    %990 = vmatpush1.bf16.msra.mxu0 %v925
    %991 = vmatprep.subr.bf16.mxu0 %v928
    %992 = vmatpush1.bf16.msra.mxu0 %v927
    %993 = vmatprep.subr.bf16.mxu0 %v930
    %994 = vmatpush1.bf16.msra.mxu0 %v929
    %995 = vmatprep.subr.bf16.mxu0 %v932
    %996 = vmatpush1.bf16.msra.mxu0 %v931
    %997 = vmatprep.subr.bf16.mxu0 %v934
    %998 = vmatpush1.bf16.msra.mxu0 %v933
    %999 = vmatprep.subr.bf16.mxu0 %v936
    %1000 = vmatpush1.bf16.msra.mxu0 %v935
    %1001 = vmatprep.subr.bf16.mxu0 %v938
    %1002 = vmatpush1.bf16.msra.mxu0 %v937
    %1003 = vmatprep.subr.bf16.mxu0 %v940
    %1004 = vmatpush1.bf16.msra.mxu0 %v939
    %1005 = vmatprep.mubr.bf16.mxu0 %v780
    %1006 = vmatmul.mubr.bf16.gmra.mrb[0].mxu0 %v779
    %v1007 = vpop.f32.mrb[0].mxu0
    %v1008 = vadd.f32 0.0, %v1007
    %v1009 = vpop.f32.mrb[0].mxu0
    %v1010 = vadd.f32 0.0, %v1009
    %v1011 = vpop.f32.mrb[0].mxu0
    %v1012 = vadd.f32 0.0, %v1011
    %v1013 = vpop.f32.mrb[0].mxu0
    %v1014 = vadd.f32 0.0, %v1013
    %1015 = vdwg.mxu0
    %v1016 = vld [vmem:[%s8] sm:$0x3]
    %v1017 = vld [vmem:[%s9] sm:$0x3]
    %v1018 = vadd.f32 %v1008, %v1012
    %v1019 = vrot.slane %v1018, 4
    %v1020 = vadd.f32 %v1018, %v1019
    %v1021 = vrot.slane %v1020, 2
    %v1022 = vadd.f32 %v1020, %v1021
    %v1023 = vrot.slane %v1022, 1
    %v1024 = vadd.f32 %v1022, %v1023
    %v1025 = vadd.f32 %v1010, %v1014
    %v1026 = vrot.slane %v1025, 4
    %v1027 = vadd.f32 %v1025, %v1026
    %v1028 = vrot.slane %v1027, 2
    %v1029 = vadd.f32 %v1027, %v1028
    %v1030 = vrot.slane %v1029, 1
    %v1031 = vadd.f32 %v1029, %v1030
    %v1032 = vmul.f32 %v1024, 0.125
    %v1033 = vmul.f32 %v1031, 0.125
    %v1034 = vsub.f32 %v1008, %v1032
    %v1035 = vsub.f32 %v1010, %v1033
    %v1036 = vsub.f32 %v1012, %v1032
    %v1037 = vsub.f32 %v1014, %v1033
    %v1038 = vsel %vm348, %v1034, 0.0
    %v1039 = vsel %vm348, %v1035, 0.0
    %v1040 = vsel %vm349, %v1036, 0.0
    %v1041 = vsel %vm349, %v1037, 0.0
    %v1042 = vmul.f32 %v1038, %v1038
    %v1043 = vmul.f32 %v1039, %v1039
    %v1044 = vmul.f32 %v1040, %v1040
    %v1045 = vmul.f32 %v1041, %v1041
    %v1046 = vadd.f32 %v1042, %v1044
    %v1047 = vrot.slane %v1046, 4
    %v1048 = vadd.f32 %v1046, %v1047
    %v1049 = vrot.slane %v1048, 2
    %v1050 = vadd.f32 %v1048, %v1049
    %v1051 = vrot.slane %v1050, 1
    %v1052 = vadd.f32 %v1050, %v1051
    %v1053 = vadd.f32 %v1043, %v1045
    %v1054 = vrot.slane %v1053, 4
    %v1055 = vadd.f32 %v1053, %v1054
    %v1056 = vrot.slane %v1055, 2
    %v1057 = vadd.f32 %v1055, %v1056
    %v1058 = vrot.slane %v1057, 1
    %v1059 = vadd.f32 %v1057, %v1058
    %v1060 = vmul.f32 %v1052, 0.125
    %v1061 = vmul.f32 %v1059, 0.125
    %v1062 = vadd.f32 %v1060, 1e-05
    %v1063 = vadd.f32 %v1061, 1e-05
    %v1064 = vrsqrt.pop %v1062
    %v1065 = vrsqrt.pop %v1063
    %v1068 = vcombine.low %v1064, %v1065
    %v1070 = vunpack.c.l.s4 1966171168
    %v1071 = vunpack.c.0.s8 %v1070
    %v1072 = vlaneseq
    %v1073 = vshrl.u32 %v1072, 7
    %v1074 = vsub.s32 %v1071, %v1073
    %v1075 = vrot.slane %v1068, %v1074
    %v1077 = vunpack.c.l.s4 1966171168
    %v1078 = vunpack.c.0.s8 %v1077
    %v1079 = vlaneseq
    %v1080 = vshrl.u32 %v1079, 7
    %v1081 = vsub.s32 %v1078, %v1080
    %v1082 = vrot.slane %v1075, %v1081
    %v1084 = vmul.f32 %v1016, %v1082
    %v1086 = vlaneseq
    %v1087 = vshrl.u32 %v1086, 7
    %v1088 = vsub.s32 0, %v1087
    %v1089 = vrot.slane %v1084, %v1088
    %v1090 = vlaneseq
    %v1091 = vshrl.u32 %v1090, 7
    %v1092 = vsub.s32 1, %v1091
    %v1093 = vrot.slane %v1084, %v1092
    %v1096 = vmul.f32 %v1038, %v1089
    %v1097 = vmul.f32 %v1039, %v1093
    %v1098 = vmul.f32 %v1040, %v1089
    %v1099 = vmul.f32 %v1041, %v1093
    %v1101 = vlaneseq
    %v1102 = vshrl.u32 %v1101, 7
    %v1103 = vsub.s32 0, %v1102
    %v1104 = vrot.slane %v1017, %v1103
    %v1105 = vlaneseq
    %v1106 = vshrl.u32 %v1105, 7
    %v1107 = vsub.s32 1, %v1106
    %v1108 = vrot.slane %v1017, %v1107
    %v1111 = vadd.f32 %v1096, %v1104
    %v1112 = vadd.f32 %v1097, %v1108
    %v1113 = vadd.f32 %v1098, %v1104
    %v1114 = vadd.f32 %v1099, %v1108
    %v1115 = vsel %vm348, %v1111, 0.0
    %v1116 = vsel %vm348, %v1112, 0.0
    %v1117 = vsel %vm349, %v1113, 0.0
    %v1118 = vsel %vm349, %v1114, 0.0
    %1119 = vst [vmem:[%s10] sm:$0xff] %v1115
    %1120 = vst [vmem:[%s10 + $0x8] sm:$0xff] %v1116
    %1121 = vst [vmem:[%s10 + $0x10] sm:$0xff] %v1117
    %1122 = vst [vmem:[%s10 + $0x18] sm:$0xff] %v1118
    // Predicated region
    $region54: #{_projection_mlp_impl.1} parent=1 // pred_check
      _
    $region55: #{_projection_mlp_impl.1} parent=1 // pred_check_branch
      %1124 = sbr.rel (0) target = $region57
    $region56: #{_projection_mlp_impl.1} parent=1 // pred_region
      _
    $region57: #{_projection_mlp_impl.1} parent=1 // pred_fallthru
      _
    // Predicated region
    $region58: #{_projection_mlp_impl.1} parent=1 // pred_check
      _
    $region59: #{_projection_mlp_impl.1} parent=1 // pred_check_branch
      %1126 = sbr.rel (0) target = $region61
    $region60: #{_projection_mlp_impl.1} parent=1 // pred_region
      _
    $region61: #{_projection_mlp_impl.1} parent=1 // pred_fallthru
      _
    %1127 = vsyncpa [#allocation3], 1
    %1128 = vsyncpa [#allocation5], 1

</llo_original>
